<compile_context>
chip_gen: v7x
topology: tpu7x:2x2x1
jax: 0.10.0
libtpu: 0.0.40
codegen_flags: <defaults>
</compile_context>

<pallas_src>
import functools

import numpy as np
import jax
import jax.numpy as jnp
from jax.experimental import pallas as pl
from jax.experimental.pallas import tpu as pltpu


# ------------------------- fused predictive kernel -------------------------
def _sgp_kernel(jitter, z_ref, zn_ref, xt_ref, scale_ref, beta_ref, a_ref, b_ref,
                m_ref, v_ref):
    Zb = z_ref[...]                       # (M, d_in)   pseudo inputs
    Xt = xt_ref[...]                      # (d_in, tn)  data points, N on the lane axis
    zn = zn_ref[...]                      # (M, 1)      |z|^2 (precomputed)
    scale = scale_ref[0]                  # (1, 1)      -0.5 / ls_d

    # RBF cross-kernel kZX_d  (M, tn)
    cross = jnp.dot(Zb, Xt, preferred_element_type=jnp.float32)       # (M, tn)
    xn = jnp.sum(Xt * Xt, axis=0, keepdims=True)                      # (1, tn)
    kzx = jnp.exp((zn - 2.0 * cross + xn) * scale)                    # (M, tn)

    # predictive mean:  m_d = beta_d^T kzx,  beta_d = kZZ_d^{-1} M[:, d]   (precomputed)
    m_ref[0] = jnp.dot(beta_ref[0], kzx, preferred_element_type=jnp.float32)   # (1, tn)

    # predictive variance (stable Cholesky-factored form):
    #   w = R_d^{-1} kzx,   v_d = (1+jitter) - ||w||^2 + ||(R_d^{-1} Ltril_d)^T w||^2
    w = jnp.dot(a_ref[0], kzx, preferred_element_type=jnp.float32)    # (M, tn)
    u = jnp.dot(b_ref[0], w, preferred_element_type=jnp.float32)      # (M, tn)
    q1 = jnp.sum(w * w, axis=0, keepdims=True)                        # (1, tn)
    q2 = jnp.sum(u * u, axis=0, keepdims=True)                        # (1, tn)
    v_ref[0] = (1.0 + jitter) - q1 + q2


def sparse_gp_forward(Z, znorm, Xt, scale, beta, A, B, jitter, *, tile_n=256):
    Mn, d_in = Z.shape
    _, N = Xt.shape
    D = beta.shape[0]
    tn = N if N <= tile_n else tile_n
    grid = (D, pl.cdiv(N, tn))

    m, v = pl.pallas_call(
        functools.partial(_sgp_kernel, jitter),
        out_shape=(jax.ShapeDtypeStruct((D, 1, N), jnp.float32),
                   jax.ShapeDtypeStruct((D, 1, N), jnp.float32)),
        grid_spec=pltpu.PrefetchScalarGridSpec(
            num_scalar_prefetch=0,
            grid=grid,
            in_specs=[
                pl.BlockSpec((Mn, d_in), lambda d, j: (0, 0)),      # Z
                pl.BlockSpec((Mn, 1), lambda d, j: (0, 0)),         # |z|^2
                pl.BlockSpec((d_in, tn), lambda d, j: (0, j)),      # X^T tile (lane-dense in N)
                pl.BlockSpec((1, 1, 1), lambda d, j: (d, 0, 0)),    # -0.5/ls_d
                pl.BlockSpec((1, 1, Mn), lambda d, j: (d, 0, 0)),   # beta_d
                pl.BlockSpec((1, Mn, Mn), lambda d, j: (d, 0, 0)),  # A_d = R_d^{-1}
                pl.BlockSpec((1, Mn, Mn), lambda d, j: (d, 0, 0)),  # B_d = (R_d^{-1} Ltril_d)^T
            ],
            out_specs=(
                pl.BlockSpec((1, 1, tn), lambda d, j: (d, 0, j)),   # mean
                pl.BlockSpec((1, 1, tn), lambda d, j: (d, 0, j)),   # variance
            ),
        ),
        compiler_params=pltpu.CompilerParams(
            dimension_semantics=("parallel", "parallel")),
    )(Z, znorm, Xt, scale, beta, A, B)
    return m, v


# ------------------------- Module wrapper -------------------------
class SparseGPPallas:
    """Pallas port of SparseGP(num_pseudo, dim_input, dim_output).forward."""

    def __init__(self, num_pseudo, dim_input, dim_output, key, jitter=1e-5):
        self.num_pseudo = num_pseudo
        self.dim_input = dim_input
        self.dim_output = dim_output
        self.jitter = float(jitter)
        # Parameters, same init scheme as the PyTorch reference (but f32 on TPU).
        self.Z = jax.random.uniform(key, (num_pseudo, dim_input), jnp.float32)
        self.log_ls = jnp.zeros((dim_output,), jnp.float32)
        self.M = jnp.zeros((num_pseudo, dim_output), jnp.float32)
        self.L = jnp.tile(jnp.eye(num_pseudo, dtype=jnp.float32),
                          (dim_output, 1)).reshape(dim_output, 1, num_pseudo, num_pseudo)
        self._cache = None

    # ---- one-time, parameter-only precompute (hoisted out of the per-forward kernel) ----
    def precompute(self):
        # TODO(synk): Cholesky / linear solves have no Pallas equivalent; they are parameter-only,
        # run once on host (numpy, float64) so the per-forward Pallas kernel is pure matmuls + exp.
        D, Mn = self.dim_output, self.num_pseudo
        Z = np.asarray(self.Z, np.float64)
        ls = np.exp(np.asarray(self.log_ls, np.float64))
        Mv = np.asarray(self.M, np.float64)
        L = np.asarray(self.L, np.float64)

        zsq = np.sum(Z * Z, axis=1, keepdims=True)                 # (Mn, 1)
        sqd = zsq - 2.0 * Z @ Z.T + zsq.T                          # (Mn, Mn)
        eye = np.eye(Mn)

        A = np.zeros((D, Mn, Mn))
        B = np.zeros((D, Mn, Mn))
        beta = np.zeros((D, 1, Mn))
        for d in range(D):
            kZZ = np.exp(-0.5 * sqd / ls[d]) + self.jitter * eye   # matrix3 for output dim d
            R = np.linalg.cholesky(kZZ)                            # kZZ = R R^T
            Rinv = np.linalg.inv(R)
            Kinv = Rinv.T @ Rinv
            beta[d, 0] = Kinv @ Mv[:, d]
            Ltril = np.tril(L[d, 0])
            A[d] = Rinv                                            # w = A kzx
            B[d] = (Rinv @ Ltril).T                                # ||B w||^2 = kzx^T Kinv S Kinv kzx

        self._cache = dict(
            Z=jnp.asarray(Z, jnp.float32),
            znorm=jnp.asarray(zsq, jnp.float32),
            scale=jnp.asarray((-0.5 / ls).reshape(D, 1, 1), jnp.float32),
            beta=jnp.asarray(beta, jnp.float32),
            A=jnp.asarray(A, jnp.float32),
            B=jnp.asarray(B, jnp.float32),
        )
        return self

    def __call__(self, X, *, tile_n=256):
        if self._cache is None:
            self.precompute()
        c = self._cache
        Xt = jnp.asarray(X, jnp.float32).T                          # (d_in, N): N on lanes
        m, v = sparse_gp_forward(c["Z"], c["znorm"], Xt, c["scale"], c["beta"],
                                 c["A"], c["B"], self.jitter, tile_n=tile_n)
        D = self.dim_output
        # matches torch's `.view((-1, dim_output))` of the (D, N, 1, 1) tensors (flat reinterpret)
        return m.reshape(-1, D), v.reshape(-1, D)


# ------------------------- float64 numpy reference (mirrors the torch code) -------------------------
def reference(gp, X):
    Z = np.asarray(gp.Z, np.float64)
    Mv = np.asarray(gp.M, np.float64)
    L = np.asarray(gp.L, np.float64)
    Xn = np.asarray(X, np.float64)
    D, Mn = gp.dim_output, gp.num_pseudo
    N = Xn.shape[0]
    ls = np.exp(np.asarray(gp.log_ls, np.float64))

    def sqdist(a, b):
        return (np.sum(a * a, 1)[:, None] - 2.0 * a @ b.T + np.sum(b * b, 1)[None, :])

    kZZ = np.exp(-0.5 * sqdist(Z, Z)[None] / ls[:, None, None]) + gp.jitter * np.eye(Mn)[None]
    kZX = np.exp(-0.5 * sqdist(Z, Xn)[None] / ls[:, None, None])            # (D, Mn, N)
    kXX = np.full((D, N), 1.0 + gp.jitter)                                  # cross3(X,X)=1 plus jitter*eye(1)
    alpha = np.linalg.solve(kZZ, kZX)                                       # (D, Mn, N)
    m = np.einsum('md,dmn->dn', Mv, alpha)                                  # MT @ alpha
    Ltril = np.tril(L[:, 0])
    S = Ltril @ np.swapaxes(Ltril, 1, 2)
    quad = np.einsum('dmn,dmk,dkn->dn', alpha, kZZ - S, alpha)
    sigma = kXX - quad
    return m.reshape(-1, D), sigma.reshape(-1, D)


if __name__ == "__main__":
    num_pseudo, dim_input, dim_output = 16, 5, 3
    N = 256

    key = jax.random.PRNGKey(0)
    kz, km, kl, kx = jax.random.split(key, 4)

    gp = SparseGPPallas(num_pseudo, dim_input, dim_output, kz)
    # Give the (default zero / identity) variational parameters non-trivial values so the
    # check exercises both the mean and variance paths.
    gp.M = 0.5 * jax.random.normal(km, (num_pseudo, dim_output), jnp.float32)
    gp.L = (jnp.eye(num_pseudo, dtype=jnp.float32)[None, None]
            + 0.3 * jax.random.normal(kl, (dim_output, 1, num_pseudo, num_pseudo), jnp.float32))
    gp.log_ls = jnp.log(jnp.linspace(0.3, 0.8, dim_output).astype(jnp.float32))
    gp.precompute()

    X = jax.random.uniform(kx, (N, dim_input), jnp.float32)

    m, v = gp(X, tile_n=128)
    m = jax.block_until_ready(m)
    v = jax.block_until_ready(v)

    m_ref, v_ref = reference(gp, X)

    assert m.shape == (N, dim_output) and v.shape == (N, dim_output)
    assert np.allclose(np.asarray(m, np.float64), m_ref, atol=2e-3, rtol=2e-3), "mean mismatch vs reference"
    assert np.allclose(np.asarray(v, np.float64), v_ref, atol=2e-3, rtol=2e-3), "variance mismatch vs reference"
    print("KERNEL_OK")
</pallas_src>

<mosaic_0001>
module attributes {stable_mosaic.version = 11 : i64} {
  func.func @_sgp_kernel(%arg0: i32, %arg1: i32, %arg2: memref<16x5xf32, #tpu.memory_space<vmem>>, %arg3: memref<16x1xf32, #tpu.memory_space<vmem>>, %arg4: memref<5x128xf32, #tpu.memory_space<vmem>>, %arg5: memref<1x1x1xf32, #tpu.memory_space<vmem>>, %arg6: memref<1x1x16xf32, #tpu.memory_space<vmem>>, %arg7: memref<1x16x16xf32, #tpu.memory_space<vmem>>, %arg8: memref<1x16x16xf32, #tpu.memory_space<vmem>>, %arg9: memref<1x1x128xf32, #tpu.memory_space<vmem>>, %arg10: memref<1x1x128xf32, #tpu.memory_space<vmem>>) attributes {dimension_semantics = [#tpu.dimension_semantics<parallel>, #tpu.dimension_semantics<parallel>], iteration_bounds = array<i64: 3, 2>, scalar_prefetch = 0 : i64, scratch_operands = 0 : i64, tpu.core_type = #tpu.core_type<tc>, window_params = [{pipeline_mode = #tpu.pipeline_mode<synchronous>, transform_indices = @transform_0, window_bounds = array<i64: 16, 5>}, {pipeline_mode = #tpu.pipeline_mode<synchronous>, transform_indices = @transform_1, window_bounds = array<i64: 16, 1>}, {transform_indices = @transform_2, window_bounds = array<i64: 5, 128>}, {transform_indices = @transform_3, window_bounds = array<i64: 1, 1, 1>}, {transform_indices = @transform_4, window_bounds = array<i64: 1, 1, 16>}, {transform_indices = @transform_5, window_bounds = array<i64: 1, 16, 16>}, {transform_indices = @transform_6, window_bounds = array<i64: 1, 16, 16>}, {transform_indices = @transform_7, window_bounds = array<i64: 1, 1, 128>}, {transform_indices = @transform_8, window_bounds = array<i64: 1, 1, 128>}]} {
    %c0 = arith.constant 0 : index
    %c0_0 = arith.constant 0 : index
    %0 = vector.load %arg2[%c0, %c0_0] : memref<16x5xf32, #tpu.memory_space<vmem>>, vector<16x5xf32>
    %c0_1 = arith.constant 0 : index
    %c0_2 = arith.constant 0 : index
    %1 = vector.load %arg4[%c0_1, %c0_2] : memref<5x128xf32, #tpu.memory_space<vmem>>, vector<5x128xf32>
    %c0_3 = arith.constant 0 : index
    %c0_4 = arith.constant 0 : index
    %2 = vector.load %arg3[%c0_3, %c0_4] : memref<16x1xf32, #tpu.memory_space<vmem>>, vector<16x1xf32>
    %c0_5 = arith.constant 0 : index
    %c0_6 = arith.constant 0 : index
    %c0_7 = arith.constant 0 : index
    %3 = vector.load %arg5[%c0_5, %c0_6, %c0_7] : memref<1x1x1xf32, #tpu.memory_space<vmem>>, vector<1x1x1xf32>
    %4 = vector.shape_cast %3 : vector<1x1x1xf32> to vector<1x1xf32>
    %cst = arith.constant dense<0.000000e+00> : vector<16x128xf32>
    %5 = tpu.matmul %0, %1, %cst {dimension_numbers = #tpu.dot_dimension_numbers<[1], [0], [0], [1], [0, 0, 1, 1], [], []>} : vector<16x5xf32>, vector<5x128xf32>, vector<16x128xf32> -> vector<16x128xf32>
    %6 = arith.mulf %1, %1 : vector<5x128xf32>
    %cst_8 = arith.constant dense<0.000000e+00> : vector<128xf32>
    %7 = vector.multi_reduction <add>, %6, %cst_8 [0] : vector<5x128xf32> to vector<128xf32>
    %8 = vector.shape_cast %7 : vector<128xf32> to vector<1x128xf32>
    %cst_9 = arith.constant 2.000000e+00 : f32
    %9 = vector.broadcast %cst_9 : f32 to vector<16x128xf32>
    %10 = arith.mulf %9, %5 : vector<16x128xf32>
    %11 = vector.broadcast %2 : vector<16x1xf32> to vector<16x128xf32>
    %12 = arith.subf %11, %10 : vector<16x128xf32>
    %13 = vector.broadcast %8 : vector<1x128xf32> to vector<16x128xf32>
    %14 = arith.addf %12, %13 : vector<16x128xf32>
    %15 = vector.broadcast %4 : vector<1x1xf32> to vector<16x128xf32>
    %16 = arith.mulf %14, %15 : vector<16x128xf32>
    %17 = math.exp %16 : vector<16x128xf32>
    %c0_10 = arith.constant 0 : index
    %c0_11 = arith.constant 0 : index
    %c0_12 = arith.constant 0 : index
    %18 = vector.load %arg6[%c0_10, %c0_11, %c0_12] : memref<1x1x16xf32, #tpu.memory_space<vmem>>, vector<1x1x16xf32>
    %19 = vector.shape_cast %18 : vector<1x1x16xf32> to vector<1x16xf32>
    %cst_13 = arith.constant dense<0.000000e+00> : vector<1x128xf32>
    %20 = tpu.matmul %19, %17, %cst_13 {dimension_numbers = #tpu.dot_dimension_numbers<[1], [0], [0], [1], [0, 0, 1, 1], [], []>} : vector<1x16xf32>, vector<16x128xf32>, vector<1x128xf32> -> vector<1x128xf32>
    %c0_14 = arith.constant 0 : index
    %c0_15 = arith.constant 0 : index
    %c0_16 = arith.constant 0 : index
    %21 = vector.load %arg9[%c0_14, %c0_15, %c0_16] : memref<1x1x128xf32, #tpu.memory_space<vmem>>, vector<1x1x128xf32>
    %22 = vector.shape_cast %21 : vector<1x1x128xf32> to vector<1x128xf32>
    %23 = vector.shape_cast %20 : vector<1x128xf32> to vector<1x1x128xf32>
    tpu.vector_store %arg9[%c0_14, %c0_15, %c0_16], %23 {strides = array<i32>} : memref<1x1x128xf32, #tpu.memory_space<vmem>>, vector<1x1x128xf32>,
    %c0_17 = arith.constant 0 : index
    %c0_18 = arith.constant 0 : index
    %c0_19 = arith.constant 0 : index
    %24 = vector.load %arg7[%c0_17, %c0_18, %c0_19] : memref<1x16x16xf32, #tpu.memory_space<vmem>>, vector<1x16x16xf32>
    %25 = vector.shape_cast %24 : vector<1x16x16xf32> to vector<16x16xf32>
    %cst_20 = arith.constant dense<0.000000e+00> : vector<16x128xf32>
    %26 = tpu.matmul %25, %17, %cst_20 {dimension_numbers = #tpu.dot_dimension_numbers<[1], [0], [0], [1], [0, 0, 1, 1], [], []>} : vector<16x16xf32>, vector<16x128xf32>, vector<16x128xf32> -> vector<16x128xf32>
    %c0_21 = arith.constant 0 : index
    %c0_22 = arith.constant 0 : index
    %c0_23 = arith.constant 0 : index
    %27 = vector.load %arg8[%c0_21, %c0_22, %c0_23] : memref<1x16x16xf32, #tpu.memory_space<vmem>>, vector<1x16x16xf32>
    %28 = vector.shape_cast %27 : vector<1x16x16xf32> to vector<16x16xf32>
    %cst_24 = arith.constant dense<0.000000e+00> : vector<16x128xf32>
    %29 = tpu.matmul %28, %26, %cst_24 {dimension_numbers = #tpu.dot_dimension_numbers<[1], [0], [0], [1], [0, 0, 1, 1], [], []>} : vector<16x16xf32>, vector<16x128xf32>, vector<16x128xf32> -> vector<16x128xf32>
    %30 = arith.mulf %26, %26 : vector<16x128xf32>
    %cst_25 = arith.constant dense<0.000000e+00> : vector<128xf32>
    %31 = vector.multi_reduction <add>, %30, %cst_25 [0] : vector<16x128xf32> to vector<128xf32>
    %32 = vector.shape_cast %31 : vector<128xf32> to vector<1x128xf32>
    %33 = arith.mulf %29, %29 : vector<16x128xf32>
    %cst_26 = arith.constant dense<0.000000e+00> : vector<128xf32>
    %34 = vector.multi_reduction <add>, %33, %cst_26 [0] : vector<16x128xf32> to vector<128xf32>
    %35 = vector.shape_cast %34 : vector<128xf32> to vector<1x128xf32>
    %cst_27 = arith.constant 1.000010e+00 : f32
    %36 = vector.broadcast %cst_27 : f32 to vector<1x128xf32>
    %37 = arith.subf %36, %32 : vector<1x128xf32>
    %38 = arith.addf %37, %35 : vector<1x128xf32>
    %c0_28 = arith.constant 0 : index
    %c0_29 = arith.constant 0 : index
    %c0_30 = arith.constant 0 : index
    %39 = vector.load %arg10[%c0_28, %c0_29, %c0_30] : memref<1x1x128xf32, #tpu.memory_space<vmem>>, vector<1x1x128xf32>
    %40 = vector.shape_cast %39 : vector<1x1x128xf32> to vector<1x128xf32>
    %41 = vector.shape_cast %38 : vector<1x128xf32> to vector<1x1x128xf32>
    tpu.vector_store %arg10[%c0_28, %c0_29, %c0_30], %41 {strides = array<i32>} : memref<1x1x128xf32, #tpu.memory_space<vmem>>, vector<1x1x128xf32>,
    return
  }
  func.func @transform_0(%arg0: i32, %arg1: i32) -> (i32, i32) {
    %c0_i32 = arith.constant 0 : i32
    %c0_i32_0 = arith.constant 0 : i32
    %c0_i32_1 = arith.constant 0 : i32
    return %c0_i32, %c0_i32_0 : i32, i32
  }
  func.func @transform_1(%arg0: i32, %arg1: i32) -> (i32, i32) {
    %c0_i32 = arith.constant 0 : i32
    %c0_i32_0 = arith.constant 0 : i32
    %c0_i32_1 = arith.constant 0 : i32
    return %c0_i32, %c0_i32_0 : i32, i32
  }
  func.func @transform_2(%arg0: i32, %arg1: i32) -> (i32, i32) {
    %c0_i32 = arith.constant 0 : i32
    %c0_i32_0 = arith.constant 0 : i32
    return %c0_i32, %arg1 : i32, i32
  }
  func.func @transform_3(%arg0: i32, %arg1: i32) -> (i32, i32, i32) {
    %c0_i32 = arith.constant 0 : i32
    %c0_i32_0 = arith.constant 0 : i32
    %c0_i32_1 = arith.constant 0 : i32
    return %arg0, %c0_i32, %c0_i32_0 : i32, i32, i32
  }
  func.func @transform_4(%arg0: i32, %arg1: i32) -> (i32, i32, i32) {
    %c0_i32 = arith.constant 0 : i32
    %c0_i32_0 = arith.constant 0 : i32
    %c0_i32_1 = arith.constant 0 : i32
    return %arg0, %c0_i32, %c0_i32_0 : i32, i32, i32
  }
  func.func @transform_5(%arg0: i32, %arg1: i32) -> (i32, i32, i32) {
    %c0_i32 = arith.constant 0 : i32
    %c0_i32_0 = arith.constant 0 : i32
    %c0_i32_1 = arith.constant 0 : i32
    return %arg0, %c0_i32, %c0_i32_0 : i32, i32, i32
  }
  func.func @transform_6(%arg0: i32, %arg1: i32) -> (i32, i32, i32) {
    %c0_i32 = arith.constant 0 : i32
    %c0_i32_0 = arith.constant 0 : i32
    %c0_i32_1 = arith.constant 0 : i32
    return %arg0, %c0_i32, %c0_i32_0 : i32, i32, i32
  }
  func.func @transform_7(%arg0: i32, %arg1: i32) -> (i32, i32, i32) {
    %c0_i32 = arith.constant 0 : i32
    %c0_i32_0 = arith.constant 0 : i32
    return %arg0, %c0_i32, %arg1 : i32, i32, i32
  }
  func.func @transform_8(%arg0: i32, %arg1: i32) -> (i32, i32, i32) {
    %c0_i32 = arith.constant 0 : i32
    %c0_i32_0 = arith.constant 0 : i32
    return %arg0, %c0_i32, %arg1 : i32, i32, i32
  }
}

</mosaic_0001>

<llo_original>
// kernel: tpu_custom_call.1
$region0: #{tpu_custom_call.1}
  #allocation0 [shape = 'u32[]', space=smem, size = 0x4, offset = 0x4, fixed_abs, tag = 'smem constant byte address 0x4 - core index']
  #allocation1 [shape = 'u32[144,128]{1,0:T(1,128)}', space=vmem, size = 0x12000, scoped, tag = 'internal scratch']
  %s0 = inlined_call_operand.vmem [shape: f32[16,5], index: 0, kind: input, shape index: {}]
  %s1 = inlined_call_operand.vmem [shape: f32[16,1], index: 1, kind: input, shape index: {}]
  %s2 = inlined_call_operand.hbm [shape: f32[5,256], index: 2, kind: input, shape index: {}]
  %s3 = inlined_call_operand.vmem [shape: f32[3,1,1], index: 3, kind: input, shape index: {}]
  %s4 = inlined_call_operand.vmem [shape: f32[3,1,16], index: 4, kind: input, shape index: {}]
  %s5 = inlined_call_operand.vmem [shape: f32[3,16,16], index: 5, kind: input, shape index: {}]
  %s6 = inlined_call_operand.hbm [shape: f32[3,16,16], index: 6, kind: input, shape index: {}]
  %s7 = inlined_call_operand.hbm [shape: f32[3,1,256], index: 7, kind: output, shape index: {0}]
  %s8 = inlined_call_operand.hbm [shape: f32[3,1,256], index: 8, kind: output, shape index: {1}]
  %9 = xla_tuple %s7, %s8
  %s10 = sld [smem:[#allocation0]]
  $region77: #{tpu_custom_call.1} parent=0
    _
  %s12 = ssub.s32 1, %s10
  %s13 = scalar_select 0, %s12, %s10
  $region1: #{tpu_custom_call.1} parent=0
    #allocation2 [shape = 'u8[8192]{0}', space=vmem, size = 0x2000, scoped, tag = 'input window, operand 2']
    #allocation3 [shape = 's32[2]{0}', space=sflag, size = 0x8, scoped, tag = 'scoped memory for tpu_custom_call.1']
    #allocation4 [shape = 's32[2]{0}', space=sflag, size = 0x8, scoped, tag = 'scoped memory for tpu_custom_call.1']
    #allocation5 [shape = 'u8[16384]{0}', space=vmem, size = 0x4000, scoped, tag = 'input window, operand 6']
    #allocation6 [shape = 's32[2]{0}', space=sflag, size = 0x8, scoped, tag = 'scoped memory for tpu_custom_call.1']
    #allocation7 [shape = 'u8[1024]{0}', space=vmem, size = 0x400, scoped, tag = 'output window, operand 0']
    #allocation8 [shape = 'u8[1024]{0}', space=vmem, size = 0x400, scoped, tag = 'output window, operand 1']
    #allocation9 [shape = 's32[2]{0}', space=sflag, size = 0x8, scoped, tag = 'scoped memory for tpu_custom_call.1']
    %14 = vsyncpa [#allocation3], 0
    %s15 = scalar_lea.sflag [#allocation3], 1
    %16 = vsyncpa %s15, 0
    %17 = vsyncpa [#allocation6], 0
    %s18 = scalar_lea.sflag [#allocation6], 1
    %19 = vsyncpa %s18, 0
    %20 = vsyncpa [#allocation4], 0
    %s21 = scalar_lea.sflag [#allocation4], 1
    %22 = vsyncpa %s21, 0
    %23 = vsyncpa [#allocation9], 0
    %s24 = scalar_lea.sflag [#allocation9], 1
    %25 = vsyncpa %s24, 0
    loop: start=0, step=1, limit=8
    $region2: #{tpu_custom_call.1} parent=1 // loop_pre_header
      _
    $region3: #{tpu_custom_call.1} parent=1 // loop_header
      %s27 = sphi 0, %s31
      %p28 = scmp.ge.s32.totalorder %s27, 8
      %s34 = sphi 0, %s46
      %s35 = sphi 0, %s42
      %s36 = sphi 0, %s34
      %s37 = sphi 0, %s35
      %s38 = sphi 0, %s36
      %s39 = sphi 0, %s37
      %s47 = sphi 0, %s47
      %s49 = sphi 0, %s47
      %s50 = sphi 0, %s49
      %s64 = sphi 0, %s50
      %s68 = sphi 0, %s68
      %s70 = sphi 0, %s68
      %s71 = sphi 0, %s70
      %s85 = sphi 0, %s71
      %s91 = sphi 0, %s93
      %s94 = sphi 0, %s91
      %s95 = sphi 0, %s94
      %s111 = sphi 0, %s95
      %s117 = sphi 0, %s119
      %s120 = sphi 0, %s117
      %s121 = sphi 0, %s120
      %s137 = sphi 0, %s121
      %s143 = sphi 0, %s145
      %s146 = sphi 0, %s143
      %s147 = sphi 0, %s146
      %s163 = sphi 0, %s147
      %s169 = sphi 0, %s171
      %s172 = sphi 0, %s169
      %s173 = sphi 0, %s172
      %s189 = sphi 0, %s173
      %s195 = sphi 0, %s197
      %s198 = sphi 0, %s195
      %s199 = sphi 0, %s198
      %s215 = sphi 0, %s199
      %s223 = sphi 0, %s225
      %s226 = sphi 0, %s223
      %s227 = sphi 0, %s226
      %s243 = sphi 0, %s227
      %s251 = sphi 0, %s253
      %s254 = sphi 0, %s251
      %s255 = sphi 0, %s254
      %s271 = sphi 0, %s255
    $region4: #{tpu_custom_call.1} parent=1 // loop_header_branch
      %30 = sbr.rel (%p28) target = $region8
    $region5: #{tpu_custom_call.1} parent=1 // loop_body
      %s32 = ssub.s32 %s27, 1
      %s33 = ssub.s32 %s27, 2
      %s40 = sadd.s32 1, %s35
      %p41 = scmp.ge.s32.totalorder %s40, 2
      %s42 = scalar_select %p41, 0, %s40
      %s43 = sadd.s32 1, %s34
      %s44 = scalar_select %p41, %s43, %s34
      %p45 = scmp.ge.s32.totalorder %s44, 3
      %s46 = scalar_select %p45, 0, %s44
      %s48 = sadd.s32 %s47, 1
      %p51 = scmp.eq.s32.totalorder %s27, 5
      %p52 = scmp.ne.s32.totalorder %s47, %s49
      %p53 = scmp.eq.s32.totalorder %s27, 0
      %p54 = por %p52, %p53
      %p55 = scmp.ne.s32.totalorder %s47, %s49
      %p56 = scmp.eq.s32.totalorder %s32, 5
      %p57 = por %p55, %p56
      %p58 = scmp.ne.s32.totalorder %s49, %s50
      %p59 = scmp.eq.s32.totalorder %s32, 0
      %p60 = por %p58, %p59
      %p61 = scmp.ne.s32.totalorder %s49, %s50
      %p62 = scmp.eq.s32.totalorder %s33, 5
      %p63 = por %p61, %p62
      %p65 = scmp.ne.s32.totalorder %s50, %s64
      %p66 = scmp.eq.s32.totalorder %s33, 0
      %p67 = por %p65, %p66
      %s69 = sadd.s32 %s68, 1
      %p72 = scmp.eq.s32.totalorder %s27, 5
      %p73 = scmp.ne.s32.totalorder %s68, %s70
      %p74 = scmp.eq.s32.totalorder %s27, 0
      %p75 = por %p73, %p74
      %p76 = scmp.ne.s32.totalorder %s68, %s70
      %p77 = scmp.eq.s32.totalorder %s32, 5
      %p78 = por %p76, %p77
      %p79 = scmp.ne.s32.totalorder %s70, %s71
      %p80 = scmp.eq.s32.totalorder %s32, 0
      %p81 = por %p79, %p80
      %p82 = scmp.ne.s32.totalorder %s70, %s71
      %p83 = scmp.eq.s32.totalorder %s33, 5
      %p84 = por %p82, %p83
      %p86 = scmp.ne.s32.totalorder %s71, %s85
      %p87 = scmp.eq.s32.totalorder %s33, 0
      %p88 = por %p86, %p87
      %s89 = ssub.s32 %s35, %s42
      %p90 = scmp.eq.s32.totalorder %s89, 0
      %s92 = sadd.s32 %s91, 1
      %s93 = scalar_select %p90, %s91, %s92
      %p96 = pneg %p90
      %p97 = scmp.eq.s32.totalorder %s27, 5
      %p98 = por %p96, %p97
      %p99 = scmp.ne.s32.totalorder %s91, %s94
      %p100 = scmp.eq.s32.totalorder %s27, 0
      %p101 = por %p99, %p100
      %p102 = scmp.ne.s32.totalorder %s91, %s94
      %p103 = scmp.eq.s32.totalorder %s32, 5
      %p104 = por %p102, %p103
      %p105 = scmp.ne.s32.totalorder %s94, %s95
      %p106 = scmp.eq.s32.totalorder %s32, 0
      %p107 = por %p105, %p106
      %p108 = scmp.ne.s32.totalorder %s94, %s95
      %p109 = scmp.eq.s32.totalorder %s33, 5
      %p110 = por %p108, %p109
      %p112 = scmp.ne.s32.totalorder %s95, %s111
      %p113 = scmp.eq.s32.totalorder %s33, 0
      %p114 = por %p112, %p113
      %s115 = ssub.s32 %s34, %s46
      %p116 = scmp.eq.s32.totalorder %s115, 0
      %s118 = sadd.s32 %s117, 1
      %s119 = scalar_select %p116, %s117, %s118
      %p122 = pneg %p116
      %p123 = scmp.eq.s32.totalorder %s27, 5
      %p124 = por %p122, %p123
      %p125 = scmp.ne.s32.totalorder %s117, %s120
      %p126 = scmp.eq.s32.totalorder %s27, 0
      %p127 = por %p125, %p126
      %p128 = scmp.ne.s32.totalorder %s117, %s120
      %p129 = scmp.eq.s32.totalorder %s32, 5
      %p130 = por %p128, %p129
      %p131 = scmp.ne.s32.totalorder %s120, %s121
      %p132 = scmp.eq.s32.totalorder %s32, 0
      %p133 = por %p131, %p132
      %p134 = scmp.ne.s32.totalorder %s120, %s121
      %p135 = scmp.eq.s32.totalorder %s33, 5
      %p136 = por %p134, %p135
      %p138 = scmp.ne.s32.totalorder %s121, %s137
      %p139 = scmp.eq.s32.totalorder %s33, 0
      %p140 = por %p138, %p139
      %s141 = ssub.s32 %s34, %s46
      %p142 = scmp.eq.s32.totalorder %s141, 0
      %s144 = sadd.s32 %s143, 1
      %s145 = scalar_select %p142, %s143, %s144
      %p148 = pneg %p142
      %p149 = scmp.eq.s32.totalorder %s27, 5
      %p150 = por %p148, %p149
      %p151 = scmp.ne.s32.totalorder %s143, %s146
      %p152 = scmp.eq.s32.totalorder %s27, 0
      %p153 = por %p151, %p152
      %p154 = scmp.ne.s32.totalorder %s143, %s146
      %p155 = scmp.eq.s32.totalorder %s32, 5
      %p156 = por %p154, %p155
      %p157 = scmp.ne.s32.totalorder %s146, %s147
      %p158 = scmp.eq.s32.totalorder %s32, 0
      %p159 = por %p157, %p158
      %p160 = scmp.ne.s32.totalorder %s146, %s147
      %p161 = scmp.eq.s32.totalorder %s33, 5
      %p162 = por %p160, %p161
      %p164 = scmp.ne.s32.totalorder %s147, %s163
      %p165 = scmp.eq.s32.totalorder %s33, 0
      %p166 = por %p164, %p165
      %s167 = ssub.s32 %s34, %s46
      %p168 = scmp.eq.s32.totalorder %s167, 0
      %s170 = sadd.s32 %s169, 1
      %s171 = scalar_select %p168, %s169, %s170
      %p174 = pneg %p168
      %p175 = scmp.eq.s32.totalorder %s27, 5
      %p176 = por %p174, %p175
      %p177 = scmp.ne.s32.totalorder %s169, %s172
      %p178 = scmp.eq.s32.totalorder %s27, 0
      %p179 = por %p177, %p178
      %p180 = scmp.ne.s32.totalorder %s169, %s172
      %p181 = scmp.eq.s32.totalorder %s32, 5
      %p182 = por %p180, %p181
      %p183 = scmp.ne.s32.totalorder %s172, %s173
      %p184 = scmp.eq.s32.totalorder %s32, 0
      %p185 = por %p183, %p184
      %p186 = scmp.ne.s32.totalorder %s172, %s173
      %p187 = scmp.eq.s32.totalorder %s33, 5
      %p188 = por %p186, %p187
      %p190 = scmp.ne.s32.totalorder %s173, %s189
      %p191 = scmp.eq.s32.totalorder %s33, 0
      %p192 = por %p190, %p191
      %s193 = ssub.s32 %s34, %s46
      %p194 = scmp.eq.s32.totalorder %s193, 0
      %s196 = sadd.s32 %s195, 1
      %s197 = scalar_select %p194, %s195, %s196
      %p200 = pneg %p194
      %p201 = scmp.eq.s32.totalorder %s27, 5
      %p202 = por %p200, %p201
      %p203 = scmp.ne.s32.totalorder %s195, %s198
      %p204 = scmp.eq.s32.totalorder %s27, 0
      %p205 = por %p203, %p204
      %p206 = scmp.ne.s32.totalorder %s195, %s198
      %p207 = scmp.eq.s32.totalorder %s32, 5
      %p208 = por %p206, %p207
      %p209 = scmp.ne.s32.totalorder %s198, %s199
      %p210 = scmp.eq.s32.totalorder %s32, 0
      %p211 = por %p209, %p210
      %p212 = scmp.ne.s32.totalorder %s198, %s199
      %p213 = scmp.eq.s32.totalorder %s33, 5
      %p214 = por %p212, %p213
      %p216 = scmp.ne.s32.totalorder %s199, %s215
      %p217 = scmp.eq.s32.totalorder %s33, 0
      %p218 = por %p216, %p217
      %s219 = ssub.s32 %s34, %s46
      %s220 = ssub.s32 %s35, %s42
      %s221 = sor.u32 %s219, %s220
      %p222 = scmp.eq.s32.totalorder %s221, 0
      %s224 = sadd.s32 %s223, 1
      %s225 = scalar_select %p222, %s223, %s224
      %p228 = pneg %p222
      %p229 = scmp.eq.s32.totalorder %s27, 5
      %p230 = por %p228, %p229
      %p231 = scmp.ne.s32.totalorder %s223, %s226
      %p232 = scmp.eq.s32.totalorder %s27, 0
      %p233 = por %p231, %p232
      %p234 = scmp.ne.s32.totalorder %s223, %s226
      %p235 = scmp.eq.s32.totalorder %s32, 5
      %p236 = por %p234, %p235
      %p237 = scmp.ne.s32.totalorder %s226, %s227
      %p238 = scmp.eq.s32.totalorder %s32, 0
      %p239 = por %p237, %p238
      %p240 = scmp.ne.s32.totalorder %s226, %s227
      %p241 = scmp.eq.s32.totalorder %s33, 5
      %p242 = por %p240, %p241
      %p244 = scmp.ne.s32.totalorder %s227, %s243
      %p245 = scmp.eq.s32.totalorder %s33, 0
      %p246 = por %p244, %p245
      %s247 = ssub.s32 %s34, %s46
      %s248 = ssub.s32 %s35, %s42
      %s249 = sor.u32 %s247, %s248
      %p250 = scmp.eq.s32.totalorder %s249, 0
      %s252 = sadd.s32 %s251, 1
      %s253 = scalar_select %p250, %s251, %s252
      %p256 = pneg %p250
      %p257 = scmp.eq.s32.totalorder %s27, 5
      %p258 = por %p256, %p257
      %p259 = scmp.ne.s32.totalorder %s251, %s254
      %p260 = scmp.eq.s32.totalorder %s27, 0
      %p261 = por %p259, %p260
      %p262 = scmp.ne.s32.totalorder %s251, %s254
      %p263 = scmp.eq.s32.totalorder %s32, 5
      %p264 = por %p262, %p263
      %p265 = scmp.ne.s32.totalorder %s254, %s255
      %p266 = scmp.eq.s32.totalorder %s32, 0
      %p267 = por %p265, %p266
      %p268 = scmp.ne.s32.totalorder %s254, %s255
      %p269 = scmp.eq.s32.totalorder %s33, 5
      %p270 = por %p268, %p269
      %p272 = scmp.ne.s32.totalorder %s255, %s271
      %p273 = scmp.eq.s32.totalorder %s33, 0
      %p274 = por %p272, %p273
      %p275 = scmp.le.s32.totalorder 1, %s27
      %p276 = scmp.lt.s32.totalorder %s27, 7
      %p277 = pnand %p275, %p276
      %p278 = pneg %p277
      // Predicated region
      $region9: #{tpu_custom_call.1} parent=5 // pred_check
        _
      $region10: #{tpu_custom_call.1} parent=5 // pred_check_branch
        %280 = sbr.rel (%p277) target = $region12
      $region11: #{tpu_custom_call.1} parent=5 // pred_region
        %s281 = ssub.s32 %s27, 1
        // Predicated region
        $region13: #{tpu_custom_call.1} parent=11 // pred_check
          %p282 = pneg %p60
        $region14: #{tpu_custom_call.1} parent=11 // pred_check_branch
          %284 = sbr.rel (%p282) target = $region16
        $region15: #{tpu_custom_call.1} parent=11 // pred_region
          _
        $region16: #{tpu_custom_call.1} parent=11 // pred_fallthru
          _
        // Predicated region
        $region17: #{tpu_custom_call.1} parent=11 // pred_check
          %p285 = pneg %p81
        $region18: #{tpu_custom_call.1} parent=11 // pred_check_branch
          %287 = sbr.rel (%p285) target = $region20
        $region19: #{tpu_custom_call.1} parent=11 // pred_region
          _
        $region20: #{tpu_custom_call.1} parent=11 // pred_fallthru
          _
      $region12: #{tpu_custom_call.1} parent=5 // pred_fallthru
        _
      %p288 = scmp.lt.s32.totalorder %s27, 6
      // Predicated region
      $region21: #{tpu_custom_call.1} parent=5 // pred_check
        %p289 = pneg %p288
      $region22: #{tpu_custom_call.1} parent=5 // pred_check_branch
        %291 = sbr.rel (%p289) target = $region24
      $region23: #{tpu_custom_call.1} parent=5 // pred_region
        // Predicated region
        $region25: #{tpu_custom_call.1} parent=23 // pred_check
          %p292 = pneg %p101
        $region26: #{tpu_custom_call.1} parent=23 // pred_check_branch
          %294 = sbr.rel (%p292) target = $region28
        $region27: #{tpu_custom_call.1} parent=23 // pred_region
          %s295 = sand.u32 %s91, 1
          %s296 = scalar_lea.sflag [#allocation3], %s295
          %s297 = sand.u32 %s91, 1
          %s298 = smul.addr %s297, 8
          %s299 = scalar_lea.vmem [#allocation2], %s298
          %s301 = ssub.s32 128, 128
          %302 = vsyncadd %s296, %s301
          %s303 = smul.addr %s35, 128
          %s304 = scalar_lea.hbm %s2, %s303
          %s306 = sshll.u32 %s299, 4
          %s307 = int_to_ptr.vmem [resolvable:$true] %s306
          %309 = dma.hbm_to_vmem [thread:$0]  %s304, 128, %s307, %s296
        $region28: #{tpu_custom_call.1} parent=23 // pred_fallthru
          _
        // Predicated region
        $region29: #{tpu_custom_call.1} parent=23 // pred_check
          %p310 = pneg %p127
        $region30: #{tpu_custom_call.1} parent=23 // pred_check_branch
          %312 = sbr.rel (%p310) target = $region32
        $region31: #{tpu_custom_call.1} parent=23 // pred_region
          %p313 = scmp.lt.s32.totalorder %s34, 2
          %s314 = scalar_select %p313, %s34, 2
          %s315 = scalar_lea.vmem %s3, %s314
        $region32: #{tpu_custom_call.1} parent=23 // pred_fallthru
          _
        // Predicated region
        $region33: #{tpu_custom_call.1} parent=23 // pred_check
          %p316 = pneg %p153
        $region34: #{tpu_custom_call.1} parent=23 // pred_check_branch
          %318 = sbr.rel (%p316) target = $region36
        $region35: #{tpu_custom_call.1} parent=23 // pred_region
          %p319 = scmp.lt.s32.totalorder %s34, 2
          %s320 = scalar_select %p319, %s34, 2
          %s321 = scalar_lea.vmem %s4, %s320
        $region36: #{tpu_custom_call.1} parent=23 // pred_fallthru
          _
        // Predicated region
        $region37: #{tpu_custom_call.1} parent=23 // pred_check
          %p322 = pneg %p179
        $region38: #{tpu_custom_call.1} parent=23 // pred_check_branch
          %324 = sbr.rel (%p322) target = $region40
        $region39: #{tpu_custom_call.1} parent=23 // pred_region
          %p325 = scmp.lt.s32.totalorder %s34, 2
          %s326 = scalar_select %p325, %s34, 2
          %s327 = smul.addr %s326, 2
          %s328 = smul.addr %s327, 8
          %s329 = scalar_lea.vmem %s5, %s328
        $region40: #{tpu_custom_call.1} parent=23 // pred_fallthru
          _
        // Predicated region
        $region41: #{tpu_custom_call.1} parent=23 // pred_check
          %p330 = pneg %p205
        $region42: #{tpu_custom_call.1} parent=23 // pred_check_branch
          %332 = sbr.rel (%p330) target = $region44
        $region43: #{tpu_custom_call.1} parent=23 // pred_region
          %s333 = sand.u32 %s195, 1
          %s334 = scalar_lea.sflag [#allocation6], %s333
          %s335 = sand.u32 %s195, 1
          %s336 = smul.addr %s335, 16
          %s337 = scalar_lea.vmem [#allocation5], %s336
          %s339 = ssub.s32 256, 256
          %340 = vsyncadd %s334, %s339
          %s341 = smul.addr %s34, 2
          %s342 = smul.addr %s341, 128
          %s343 = scalar_lea.hbm %s6, %s342
          %s344 = sshll.u32 %s337, 4
          %s345 = int_to_ptr.vmem [resolvable:$true] %s344
          %350 = dma.hbm_to_vmem [thread:$0]  %s343, 256, %s345, %s334, 128, 128, 8
        $region44: #{tpu_custom_call.1} parent=23 // pred_fallthru
          _
      $region24: #{tpu_custom_call.1} parent=5 // pred_fallthru
        _
      %p351 = scmp.le.s32.totalorder 1, %s27
      %p352 = scmp.lt.s32.totalorder %s27, 7
      %p353 = pnand %p351, %p352
      %p354 = pneg %p353
      // Predicated region
      $region45: #{tpu_custom_call.1} parent=5 // pred_check
        _
      $region46: #{tpu_custom_call.1} parent=5 // pred_check_branch
        %356 = sbr.rel (%p353) target = $region48
      $region47: #{tpu_custom_call.1} parent=5 // pred_region
        %s357 = ssub.s32 %s27, 1
        %s358 = sand.u32 %s94, 1
        %s359 = scalar_lea.sflag [#allocation3], %s358
        %s360 = sand.u32 %s94, 1
        %s361 = smul.addr %s360, 8
        %s362 = scalar_lea.vmem [#allocation2], %s361
        // Predicated region
        $region49: #{tpu_custom_call.1} parent=47 // pred_check
          %p363 = pneg %p107
        $region50: #{tpu_custom_call.1} parent=47 // pred_check_branch
          %365 = sbr.rel (%p363) target = $region52
        $region51: #{tpu_custom_call.1} parent=47 // pred_region
          %366 = dma.done %s359, 128
        $region52: #{tpu_custom_call.1} parent=47 // pred_fallthru
          _
        %s367 = sand.u32 %s198, 1
        %s368 = scalar_lea.sflag [#allocation6], %s367
        %s369 = sand.u32 %s198, 1
        %s370 = smul.addr %s369, 16
        %s371 = scalar_lea.vmem [#allocation5], %s370
        // Predicated region
        $region53: #{tpu_custom_call.1} parent=47 // pred_check
          %p372 = pneg %p211
        $region54: #{tpu_custom_call.1} parent=47 // pred_check_branch
          %374 = sbr.rel (%p372) target = $region56
        $region55: #{tpu_custom_call.1} parent=47 // pred_region
          %375 = dma.done %s368, 256
        $region56: #{tpu_custom_call.1} parent=47 // pred_fallthru
          _
        %p376 = pneg %p60
        %p377 = pneg %p57
        %p378 = pneg %p81
        %p379 = pneg %p78
        %s380 = sand.u32 %s94, 1
        %s381 = scalar_lea.sflag [#allocation3], %s380
        %s382 = sand.u32 %s94, 1
        %s383 = smul.addr %s382, 8
        %s384 = scalar_lea.vmem [#allocation2], %s383
        %p385 = pneg %p107
        %p386 = pneg %p104
        %p387 = scmp.lt.s32.totalorder %s36, 2
        %s388 = scalar_select %p387, %s36, 2
        %s389 = scalar_lea.vmem %s3, %s388
        %p390 = pneg %p133
        %p391 = pneg %p130
        %p392 = scmp.lt.s32.totalorder %s36, 2
        %s393 = scalar_select %p392, %s36, 2
        %s394 = scalar_lea.vmem %s4, %s393
        %p395 = pneg %p159
        %p396 = pneg %p156
        %p397 = scmp.lt.s32.totalorder %s36, 2
        %s398 = scalar_select %p397, %s36, 2
        %s399 = smul.addr %s398, 2
        %s400 = smul.addr %s399, 8
        %s401 = scalar_lea.vmem %s5, %s400
        %p402 = pneg %p185
        %p403 = pneg %p182
        %s404 = sand.u32 %s198, 1
        %s405 = scalar_lea.sflag [#allocation6], %s404
        %s406 = sand.u32 %s198, 1
        %s407 = smul.addr %s406, 16
        %s408 = scalar_lea.vmem [#allocation5], %s407
        %p409 = pneg %p211
        %p410 = pneg %p208
        %p411 = pneg %p239
        %p412 = pneg %p236
        %s413 = sand.u32 %s226, 1
        %s414 = scalar_lea.sflag [#allocation4], %s413
        %s415 = sand.u32 %s226, 1
        %s416 = scalar_lea.vmem [#allocation7], %s415
        %p417 = pneg %p267
        %p418 = pneg %p264
        %s419 = sand.u32 %s254, 1
        %s420 = scalar_lea.sflag [#allocation9], %s419
        %s421 = sand.u32 %s254, 1
        %s422 = scalar_lea.vmem [#allocation8], %s421
        %p423 = scmp.lt.s32.totalorder %s36, 2
        %s424 = scalar_select %p423, %s36, 2
        %s425 = scalar_lea.vmem %s3, %s424
        %p426 = scmp.lt.s32.totalorder %s36, 2
        %s427 = scalar_select %p426, %s36, 2
        %s428 = scalar_lea.vmem %s4, %s427
        %p429 = scmp.lt.s32.totalorder %s36, 2
        %s430 = scalar_select %p429, %s36, 2
        %s431 = smul.addr %s430, 2
        %s432 = smul.addr %s431, 8
        %s433 = scalar_lea.vmem %s5, %s432
        %v434 = vld [vmem:[%s0] sm:$0xff]
        %v435 = vld [vmem:[%s0 + $0x8] sm:$0xff]
        %v436 = vld [vmem:[%s362] sm:$0x1f]
        %v437 = vld [vmem:[%s1] sm:$0xff]
        %v438 = vld [vmem:[%s1 + $0x8] sm:$0xff]
        %v439 = vld [vmem:[%s425] sm:$0x1]
        %vm440 = vcmask 39936
        %v442 = vsel %vm440, %v434, 0
        %v445 = vsel %vm440, %v435, 0
        %vm447 = vcmask 1044480
        %v449 = vsel %vm447, %v436, 0
        %451 = vmatprep.subr.mxu0 0.0
        %452 = vmatpush1.msra.mxu0 %v449
        %453 = vmatprep.subr.mxu0 0.0
        %454 = vmatpush1.msra.mxu0 0.0
        %455 = vmatprep.subr.mxu0 0.0
        %456 = vmatpush1.msra.mxu0 0.0
        %457 = vmatprep.subr.mxu0 0.0
        %458 = vmatpush1.msra.mxu0 0.0
        %459 = vmatprep.subr.mxu0 0.0
        %460 = vmatpush1.msra.mxu0 0.0
        %461 = vmatprep.subr.mxu0 0.0
        %462 = vmatpush1.msra.mxu0 0.0
        %463 = vmatprep.subr.mxu0 0.0
        %464 = vmatpush1.msra.mxu0 0.0
        %465 = vmatprep.subr.mxu0 0.0
        %466 = vmatpush1.msra.mxu0 0.0
        %467 = vmatprep.subr.mxu0 0.0
        %468 = vmatpush1.msra.mxu0 0.0
        %469 = vmatprep.subr.mxu0 0.0
        %470 = vmatpush1.msra.mxu0 0.0
        %471 = vmatprep.subr.mxu0 0.0
        %472 = vmatpush1.msra.mxu0 0.0
        %473 = vmatprep.subr.mxu0 0.0
        %474 = vmatpush1.msra.mxu0 0.0
        %475 = vmatprep.subr.mxu0 0.0
        %476 = vmatpush1.msra.mxu0 0.0
        %477 = vmatprep.subr.mxu0 0.0
        %478 = vmatpush1.msra.mxu0 0.0
        %479 = vmatprep.subr.mxu0 0.0
        %480 = vmatpush1.msra.mxu0 0.0
        %481 = vmatprep.subr.mxu0 0.0
        %482 = vmatpush1.msra.mxu0 0.0
        %483 = vmatprep.subr.mxu0 0.0
        %484 = vmatpush1.msra.mxu0 0.0
        %485 = vmatprep.subr.mxu0 0.0
        %486 = vmatpush1.msra.mxu0 0.0
        %487 = vmatprep.subr.mxu0 0.0
        %488 = vmatpush1.msra.mxu0 0.0
        %489 = vmatprep.subr.mxu0 0.0
        %490 = vmatpush1.msra.mxu0 0.0
        %491 = vmatprep.subr.mxu0 0.0
        %492 = vmatpush1.msra.mxu0 0.0
        %493 = vmatprep.subr.mxu0 0.0
        %494 = vmatpush1.msra.mxu0 0.0
        %495 = vmatprep.subr.mxu0 0.0
        %496 = vmatpush1.msra.mxu0 0.0
        %497 = vmatprep.subr.mxu0 0.0
        %498 = vmatpush1.msra.mxu0 0.0
        %499 = vmatprep.subr.mxu0 0.0
        %500 = vmatpush1.msra.mxu0 0.0
        %501 = vmatprep.subr.mxu0 0.0
        %502 = vmatpush1.msra.mxu0 0.0
        %503 = vmatprep.subr.mxu0 0.0
        %504 = vmatpush1.msra.mxu0 0.0
        %505 = vmatprep.subr.mxu0 0.0
        %506 = vmatpush1.msra.mxu0 0.0
        %507 = vmatprep.subr.mxu0 0.0
        %508 = vmatpush1.msra.mxu0 0.0
        %509 = vmatprep.subr.mxu0 0.0
        %510 = vmatpush1.msra.mxu0 0.0
        %511 = vmatprep.subr.mxu0 0.0
        %512 = vmatpush1.msra.mxu0 0.0
        %513 = vmatprep.subr.mxu0 0.0
        %514 = vmatpush1.msra.mxu0 0.0
        %515 = vmatprep.mubr.f32.mxu0 0.0
        %516 = vmatmul.mubr.f32.gmra.mrb[0].mxu0 %v442
        %v517 = vpop.f32.mrb[0].mxu0
        %v518 = vadd.f32 0.0, %v517
        %v519 = vpop.f32.mrb[0].mxu0
        %520 = vmatprep.mubr.f32.mxu0 0.0
        %521 = vmatmul.mubr.f32.gmra.mrb[0].mxu0 %v445
        %v522 = vpop.f32.mrb[0].mxu0
        %v523 = vadd.f32 0.0, %v522
        %v524 = vpop.f32.mrb[0].mxu0
        %525 = vdwg.mxu0
        %v526 = vmul.f32 %v436, %v436
        %v527 = vsel %vm447, %v526, 0.0
        %v528 = vrot.slane %v527, 4
        %v529 = vadd.f32 %v527, %v528
        %v530 = vrot.slane %v529, 2
        %v531 = vadd.f32 %v529, %v530
        %v532 = vrot.slane %v531, 1
        %v533 = vadd.f32 %v531, %v532
        %v534 = vmul.f32 %v518, 2.0
        %v535 = vmul.f32 %v523, 2.0
        %537 = vset.pattern.permute.xlu0 0
        %538 = vperm.xlu0 %537, %v437
        %v539 = vpop.permute.xlu0 %538
        %542 = vset.pattern.permute.xlu0 0
        %543 = vperm.xlu0 %542, %v438
        %v544 = vpop.permute.xlu0 %543
        %v546 = vsub.f32 %v539, %v534
        %v547 = vsub.f32 %v544, %v535
        %v548 = vadd.f32 %v546, %v533
        %v549 = vadd.f32 %v547, %v533
        %v551 = vlaneseq
        %v552 = vshrl.u32 %v551, 7
        %v553 = vsub.s32 0, %v552
        %v554 = vrot.slane %v439, %v553
        %555 = vset.pattern.permute.xlu0 0
        %556 = vperm.xlu0 %555, %v554
        %v557 = vpop.permute.xlu0 %556
        %v559 = vmul.f32 %v548, %v557
        %v560 = vmul.f32 %v549, %v557
        %v561 = vmul.f32 %v559, 1.442695
        %v562 = vpow.pop %v561
        %v563 = vmul.f32 %v560, 1.442695
        %v564 = vpow.pop %v563
        %v565 = vld [vmem:[%s428] sm:$0x1]
        %vm566 = vcmask 130048
        %v568 = vsel %vm566, %v565, 0
        %570 = vmatprep.subr.mxu0 0.0
        %571 = vmatpush1.msra.mxu0 %v562
        %572 = vmatprep.subr.mxu0 0.0
        %573 = vmatpush1.msra.mxu0 %v564
        %574 = vmatprep.subr.mxu0 0.0
        %575 = vmatpush1.msra.mxu0 0.0
        %576 = vmatprep.subr.mxu0 0.0
        %577 = vmatpush1.msra.mxu0 0.0
        %578 = vmatprep.subr.mxu0 0.0
        %579 = vmatpush1.msra.mxu0 0.0
        %580 = vmatprep.subr.mxu0 0.0
        %581 = vmatpush1.msra.mxu0 0.0
        %582 = vmatprep.subr.mxu0 0.0
        %583 = vmatpush1.msra.mxu0 0.0
        %584 = vmatprep.subr.mxu0 0.0
        %585 = vmatpush1.msra.mxu0 0.0
        %586 = vmatprep.subr.mxu0 0.0
        %587 = vmatpush1.msra.mxu0 0.0
        %588 = vmatprep.subr.mxu0 0.0
        %589 = vmatpush1.msra.mxu0 0.0
        %590 = vmatprep.subr.mxu0 0.0
        %591 = vmatpush1.msra.mxu0 0.0
        %592 = vmatprep.subr.mxu0 0.0
        %593 = vmatpush1.msra.mxu0 0.0
        %594 = vmatprep.subr.mxu0 0.0
        %595 = vmatpush1.msra.mxu0 0.0
        %596 = vmatprep.subr.mxu0 0.0
        %597 = vmatpush1.msra.mxu0 0.0
        %598 = vmatprep.subr.mxu0 0.0
        %599 = vmatpush1.msra.mxu0 0.0
        %600 = vmatprep.subr.mxu0 0.0
        %601 = vmatpush1.msra.mxu0 0.0
        %602 = vmatprep.subr.mxu0 0.0
        %603 = vmatpush1.msra.mxu0 0.0
        %604 = vmatprep.subr.mxu0 0.0
        %605 = vmatpush1.msra.mxu0 0.0
        %606 = vmatprep.subr.mxu0 0.0
        %607 = vmatpush1.msra.mxu0 0.0
        %608 = vmatprep.subr.mxu0 0.0
        %609 = vmatpush1.msra.mxu0 0.0
        %610 = vmatprep.subr.mxu0 0.0
        %611 = vmatpush1.msra.mxu0 0.0
        %612 = vmatprep.subr.mxu0 0.0
        %613 = vmatpush1.msra.mxu0 0.0
        %614 = vmatprep.subr.mxu0 0.0
        %615 = vmatpush1.msra.mxu0 0.0
        %616 = vmatprep.subr.mxu0 0.0
        %617 = vmatpush1.msra.mxu0 0.0
        %618 = vmatprep.subr.mxu0 0.0
        %619 = vmatpush1.msra.mxu0 0.0
        %620 = vmatprep.subr.mxu0 0.0
        %621 = vmatpush1.msra.mxu0 0.0
        %622 = vmatprep.subr.mxu0 0.0
        %623 = vmatpush1.msra.mxu0 0.0
        %624 = vmatprep.subr.mxu0 0.0
        %625 = vmatpush1.msra.mxu0 0.0
        %626 = vmatprep.subr.mxu0 0.0
        %627 = vmatpush1.msra.mxu0 0.0
        %628 = vmatprep.subr.mxu0 0.0
        %629 = vmatpush1.msra.mxu0 0.0
        %630 = vmatprep.subr.mxu0 0.0
        %631 = vmatpush1.msra.mxu0 0.0
        %632 = vmatprep.subr.mxu0 0.0
        %633 = vmatpush1.msra.mxu0 0.0
        %634 = vmatprep.mubr.f32.mxu0 0.0
        %635 = vmatmul.mubr.f32.gmra.mrb[0].mxu0 %v568
        %v636 = vpop.f32.mrb[0].mxu0
        %v637 = vadd.f32 0.0, %v636
        %v638 = vpop.f32.mrb[0].mxu0
        %639 = vdwg.mxu0
        %640 = vst [vmem:[%s416] sm:$0x1] %v637
        %v641 = vld [vmem:[%s433] sm:$0xff]
        %v642 = vld [vmem:[%s433 + $0x8] sm:$0xff]
        %v644 = vsel %vm566, %v641, 0
        %v647 = vsel %vm566, %v642, 0
        %649 = vmatprep.subr.mxu0 0.0
        %650 = vmatpush1.msra.mxu0 %v562
        %651 = vmatprep.subr.mxu0 0.0
        %652 = vmatpush1.msra.mxu0 %v564
        %653 = vmatprep.subr.mxu0 0.0
        %654 = vmatpush1.msra.mxu0 0.0
        %655 = vmatprep.subr.mxu0 0.0
        %656 = vmatpush1.msra.mxu0 0.0
        %657 = vmatprep.subr.mxu0 0.0
        %658 = vmatpush1.msra.mxu0 0.0
        %659 = vmatprep.subr.mxu0 0.0
        %660 = vmatpush1.msra.mxu0 0.0
        %661 = vmatprep.subr.mxu0 0.0
        %662 = vmatpush1.msra.mxu0 0.0
        %663 = vmatprep.subr.mxu0 0.0
        %664 = vmatpush1.msra.mxu0 0.0
        %665 = vmatprep.subr.mxu0 0.0
        %666 = vmatpush1.msra.mxu0 0.0
        %667 = vmatprep.subr.mxu0 0.0
        %668 = vmatpush1.msra.mxu0 0.0
        %669 = vmatprep.subr.mxu0 0.0
        %670 = vmatpush1.msra.mxu0 0.0
        %671 = vmatprep.subr.mxu0 0.0
        %672 = vmatpush1.msra.mxu0 0.0
        %673 = vmatprep.subr.mxu0 0.0
        %674 = vmatpush1.msra.mxu0 0.0
        %675 = vmatprep.subr.mxu0 0.0
        %676 = vmatpush1.msra.mxu0 0.0
        %677 = vmatprep.subr.mxu0 0.0
        %678 = vmatpush1.msra.mxu0 0.0
        %679 = vmatprep.subr.mxu0 0.0
        %680 = vmatpush1.msra.mxu0 0.0
        %681 = vmatprep.subr.mxu0 0.0
        %682 = vmatpush1.msra.mxu0 0.0
        %683 = vmatprep.subr.mxu0 0.0
        %684 = vmatpush1.msra.mxu0 0.0
        %685 = vmatprep.subr.mxu0 0.0
        %686 = vmatpush1.msra.mxu0 0.0
        %687 = vmatprep.subr.mxu0 0.0
        %688 = vmatpush1.msra.mxu0 0.0
        %689 = vmatprep.subr.mxu0 0.0
        %690 = vmatpush1.msra.mxu0 0.0
        %691 = vmatprep.subr.mxu0 0.0
        %692 = vmatpush1.msra.mxu0 0.0
        %693 = vmatprep.subr.mxu0 0.0
        %694 = vmatpush1.msra.mxu0 0.0
        %695 = vmatprep.subr.mxu0 0.0
        %696 = vmatpush1.msra.mxu0 0.0
        %697 = vmatprep.subr.mxu0 0.0
        %698 = vmatpush1.msra.mxu0 0.0
        %699 = vmatprep.subr.mxu0 0.0
        %700 = vmatpush1.msra.mxu0 0.0
        %701 = vmatprep.subr.mxu0 0.0
        %702 = vmatpush1.msra.mxu0 0.0
        %703 = vmatprep.subr.mxu0 0.0
        %704 = vmatpush1.msra.mxu0 0.0
        %705 = vmatprep.subr.mxu0 0.0
        %706 = vmatpush1.msra.mxu0 0.0
        %707 = vmatprep.subr.mxu0 0.0
        %708 = vmatpush1.msra.mxu0 0.0
        %709 = vmatprep.subr.mxu0 0.0
        %710 = vmatpush1.msra.mxu0 0.0
        %711 = vmatprep.subr.mxu0 0.0
        %712 = vmatpush1.msra.mxu0 0.0
        %713 = vmatprep.mubr.f32.mxu0 0.0
        %714 = vmatmul.mubr.f32.gmra.mrb[0].mxu0 %v644
        %v715 = vpop.f32.mrb[0].mxu0
        %v716 = vadd.f32 0.0, %v715
        %v717 = vpop.f32.mrb[0].mxu0
        %718 = vmatprep.mubr.f32.mxu0 0.0
        %719 = vmatmul.mubr.f32.gmra.mrb[0].mxu0 %v647
        %v720 = vpop.f32.mrb[0].mxu0
        %v721 = vadd.f32 0.0, %v720
        %v722 = vpop.f32.mrb[0].mxu0
        %723 = vdwg.mxu0
        %v724 = vld [vmem:[%s371] sm:$0xff]
        %v725 = vld [vmem:[%s371 + $0x8] sm:$0xff]
        %v727 = vsel %vm566, %v724, 0
        %v730 = vsel %vm566, %v725, 0
        %732 = vmatprep.subr.mxu0 0.0
        %733 = vmatpush1.msra.mxu0 %v716
        %734 = vmatprep.subr.mxu0 0.0
        %735 = vmatpush1.msra.mxu0 %v721
        %736 = vmatprep.subr.mxu0 0.0
        %737 = vmatpush1.msra.mxu0 0.0
        %738 = vmatprep.subr.mxu0 0.0
        %739 = vmatpush1.msra.mxu0 0.0
        %740 = vmatprep.subr.mxu0 0.0
        %741 = vmatpush1.msra.mxu0 0.0
        %742 = vmatprep.subr.mxu0 0.0
        %743 = vmatpush1.msra.mxu0 0.0
        %744 = vmatprep.subr.mxu0 0.0
        %745 = vmatpush1.msra.mxu0 0.0
        %746 = vmatprep.subr.mxu0 0.0
        %747 = vmatpush1.msra.mxu0 0.0
        %748 = vmatprep.subr.mxu0 0.0
        %749 = vmatpush1.msra.mxu0 0.0
        %750 = vmatprep.subr.mxu0 0.0
        %751 = vmatpush1.msra.mxu0 0.0
        %752 = vmatprep.subr.mxu0 0.0
        %753 = vmatpush1.msra.mxu0 0.0
        %754 = vmatprep.subr.mxu0 0.0
        %755 = vmatpush1.msra.mxu0 0.0
        %756 = vmatprep.subr.mxu0 0.0
        %757 = vmatpush1.msra.mxu0 0.0
        %758 = vmatprep.subr.mxu0 0.0
        %759 = vmatpush1.msra.mxu0 0.0
        %760 = vmatprep.subr.mxu0 0.0
        %761 = vmatpush1.msra.mxu0 0.0
        %762 = vmatprep.subr.mxu0 0.0
        %763 = vmatpush1.msra.mxu0 0.0
        %764 = vmatprep.subr.mxu0 0.0
        %765 = vmatpush1.msra.mxu0 0.0
        %766 = vmatprep.subr.mxu0 0.0
        %767 = vmatpush1.msra.mxu0 0.0
        %768 = vmatprep.subr.mxu0 0.0
        %769 = vmatpush1.msra.mxu0 0.0
        %770 = vmatprep.subr.mxu0 0.0
        %771 = vmatpush1.msra.mxu0 0.0
        %772 = vmatprep.subr.mxu0 0.0
        %773 = vmatpush1.msra.mxu0 0.0
        %774 = vmatprep.subr.mxu0 0.0
        %775 = vmatpush1.msra.mxu0 0.0
        %776 = vmatprep.subr.mxu0 0.0
        %777 = vmatpush1.msra.mxu0 0.0
        %778 = vmatprep.subr.mxu0 0.0
        %779 = vmatpush1.msra.mxu0 0.0
        %780 = vmatprep.subr.mxu0 0.0
        %781 = vmatpush1.msra.mxu0 0.0
        %782 = vmatprep.subr.mxu0 0.0
        %783 = vmatpush1.msra.mxu0 0.0
        %784 = vmatprep.subr.mxu0 0.0
        %785 = vmatpush1.msra.mxu0 0.0
        %786 = vmatprep.subr.mxu0 0.0
        %787 = vmatpush1.msra.mxu0 0.0
        %788 = vmatprep.subr.mxu0 0.0
        %789 = vmatpush1.msra.mxu0 0.0
        %790 = vmatprep.subr.mxu0 0.0
        %791 = vmatpush1.msra.mxu0 0.0
        %792 = vmatprep.subr.mxu0 0.0
        %793 = vmatpush1.msra.mxu0 0.0
        %794 = vmatprep.subr.mxu0 0.0
        %795 = vmatpush1.msra.mxu0 0.0
        %796 = vmatprep.mubr.f32.mxu0 0.0
        %797 = vmatmul.mubr.f32.gmra.mrb[0].mxu0 %v727
        %v798 = vpop.f32.mrb[0].mxu0
        %v799 = vadd.f32 0.0, %v798
        %v800 = vpop.f32.mrb[0].mxu0
        %801 = vmatprep.mubr.f32.mxu0 0.0
        %802 = vmatmul.mubr.f32.gmra.mrb[0].mxu0 %v730
        %v803 = vpop.f32.mrb[0].mxu0
        %v804 = vadd.f32 0.0, %v803
        %v805 = vpop.f32.mrb[0].mxu0
        %806 = vdwg.mxu0
        %v807 = vmul.f32 %v716, %v716
        %v808 = vmul.f32 %v721, %v721
        %v809 = vadd.f32 %v807, %v808
        %v810 = vrot.slane %v809, 4
        %v811 = vadd.f32 %v809, %v810
        %v812 = vrot.slane %v811, 2
        %v813 = vadd.f32 %v811, %v812
        %v814 = vrot.slane %v813, 1
        %v815 = vadd.f32 %v813, %v814
        %v816 = vmul.f32 %v799, %v799
        %v817 = vmul.f32 %v804, %v804
        %v818 = vadd.f32 %v816, %v817
        %v819 = vrot.slane %v818, 4
        %v820 = vadd.f32 %v818, %v819
        %v821 = vrot.slane %v820, 2
        %v822 = vadd.f32 %v820, %v821
        %v823 = vrot.slane %v822, 1
        %v824 = vadd.f32 %v822, %v823
        %v825 = vsub.f32 1.00001, %v815
        %v826 = vadd.f32 %v825, %v824
        %827 = vst [vmem:[%s422] sm:$0x1] %v826
        %s828 = sand.u32 %s226, 1
        %s829 = scalar_lea.sflag [#allocation4], %s828
        %s830 = sand.u32 %s226, 1
        %s831 = scalar_lea.vmem [#allocation7], %s830
        %s832 = sand.u32 %s254, 1
        %s833 = scalar_lea.sflag [#allocation9], %s832
        %s834 = sand.u32 %s254, 1
        %s835 = scalar_lea.vmem [#allocation8], %s834
        // Predicated region
        $region57: #{tpu_custom_call.1} parent=47 // pred_check
          %p836 = pneg %p236
        $region58: #{tpu_custom_call.1} parent=47 // pred_check_branch
          %838 = sbr.rel (%p836) target = $region60
        $region59: #{tpu_custom_call.1} parent=47 // pred_region
          %s840 = ssub.s32 16, 16
          %841 = vsyncadd %s829, %s840
          %s842 = smul.addr %s36, 2
          %s843 = sadd.s32 %s37, %s842
          %s844 = smul.addr %s843, 16
          %s845 = scalar_lea.hbm %s7, %s844
          %s847 = sshll.u32 %s831, 4
          %s848 = int_to_ptr.vmem [resolvable:$true] %s847
          %850 = dma.vmem_to_hbm [thread:$0]  %s848, 16, %s845, %s829
        $region60: #{tpu_custom_call.1} parent=47 // pred_fallthru
          _
        // Predicated region
        $region61: #{tpu_custom_call.1} parent=47 // pred_check
          %p851 = pneg %p264
        $region62: #{tpu_custom_call.1} parent=47 // pred_check_branch
          %853 = sbr.rel (%p851) target = $region64
        $region63: #{tpu_custom_call.1} parent=47 // pred_region
          %s855 = ssub.s32 16, 16
          %856 = vsyncadd %s833, %s855
          %s857 = smul.addr %s36, 2
          %s858 = sadd.s32 %s37, %s857
          %s859 = smul.addr %s858, 16
          %s860 = scalar_lea.hbm %s8, %s859
          %s862 = sshll.u32 %s835, 4
          %s863 = int_to_ptr.vmem [resolvable:$true] %s862
          %865 = dma.vmem_to_hbm [thread:$0]  %s863, 16, %s860, %s833
        $region64: #{tpu_custom_call.1} parent=47 // pred_fallthru
          _
      $region48: #{tpu_custom_call.1} parent=5 // pred_fallthru
        _
      %p866 = scmp.le.s32.totalorder 2, %s27
      // Predicated region
      $region65: #{tpu_custom_call.1} parent=5 // pred_check
        %p867 = pneg %p866
      $region66: #{tpu_custom_call.1} parent=5 // pred_check_branch
        %869 = sbr.rel (%p867) target = $region68
      $region67: #{tpu_custom_call.1} parent=5 // pred_region
        %s870 = ssub.s32 %s27, 2
        // Predicated region
        $region69: #{tpu_custom_call.1} parent=67 // pred_check
          %p871 = pneg %p242
        $region70: #{tpu_custom_call.1} parent=67 // pred_check_branch
          %873 = sbr.rel (%p871) target = $region72
        $region71: #{tpu_custom_call.1} parent=67 // pred_region
          %s874 = sand.u32 %s227, 1
          %s875 = scalar_lea.sflag [#allocation4], %s874
          %s876 = sand.u32 %s227, 1
          %s877 = scalar_lea.vmem [#allocation7], %s876
          %878 = dma.done %s875, 16
        $region72: #{tpu_custom_call.1} parent=67 // pred_fallthru
          _
        // Predicated region
        $region73: #{tpu_custom_call.1} parent=67 // pred_check
          %p879 = pneg %p270
        $region74: #{tpu_custom_call.1} parent=67 // pred_check_branch
          %881 = sbr.rel (%p879) target = $region76
        $region75: #{tpu_custom_call.1} parent=67 // pred_region
          %s882 = sand.u32 %s255, 1
          %s883 = scalar_lea.sflag [#allocation9], %s882
          %s884 = sand.u32 %s255, 1
          %s885 = scalar_lea.vmem [#allocation8], %s884
          %886 = dma.done %s883, 16
        $region76: #{tpu_custom_call.1} parent=67 // pred_fallthru
          _
      $region68: #{tpu_custom_call.1} parent=5 // pred_fallthru
        _
    $region6: #{tpu_custom_call.1} parent=1 // loop_footer
      %s31 = sadd.s32 1, %s27
    $region7: #{tpu_custom_call.1} parent=1 // loop_footer_branch
      %26 = sbr.rel target = $region3
    $region8: #{tpu_custom_call.1} parent=1 // loop_exit
      _
    %887 = vsyncpa [#allocation3], 1
    %s888 = scalar_lea.sflag [#allocation3], 1
    %889 = vsyncpa %s888, 1
    %890 = vsyncpa [#allocation6], 1
    %s891 = scalar_lea.sflag [#allocation6], 1
    %892 = vsyncpa %s891, 1
    %893 = vsyncpa [#allocation4], 1
    %s894 = scalar_lea.sflag [#allocation4], 1
    %895 = vsyncpa %s894, 1
    %896 = vsyncpa [#allocation9], 1
    %s897 = scalar_lea.sflag [#allocation9], 1
    %898 = vsyncpa %s897, 1

</llo_original>
